<compile_context>
chip_gen: v5e
topology: v5e:2x2
jax: 0.10.0
libtpu: 0.0.40
codegen_flags: <defaults>
</compile_context>

<pallas_src>
import jax
import jax.numpy as jnp
from jax.experimental import pallas as pl
from jax.experimental.pallas import tpu as pltpu

EPS = 1e-6            # TODO(synk): module-level EPS is undefined in the source snippet.
_ISCLOSE_ATOL = 1e-8  # torch.isclose(x, 0) default: atol=1e-8 (rtol term vanishes vs 0).

_LANES = 128                 # edge pairs per row
_PAIR_LANES = 2 * _LANES     # interleaved x/y lanes per row (256)
_MAX_TILE_ROWS = 256         # 256x256 f32 = 256 KiB per input per grid step


def _edges_intersect_kernel(p_ref, e1_ref, q_ref, e2_ref, o_ref):
    p = p_ref[...]
    q = q_ref[...]
    r = e1_ref[...] - p
    s = e2_ref[...] - q

    # Shrink both segments inward by EPS (same op order as the reference).
    p = p + EPS * r
    q = q + EPS * s
    scale = 1.0 - 2.0 * EPS
    r = r * scale
    s = s * scale
    qmp = q - p

    # ---- partner swap (x<->y within each interleaved lane pair) ------------
    lane = jax.lax.broadcasted_iota(jnp.int32, p.shape, 1)
    partner = lane ^ 1
    # Roll an iota by the same static amounts as the data; whichever roll
    # delivers the partner lane is selected (direction-convention proof).
    take_r1 = pltpu.roll(lane, 1, axis=1) == partner

    def swap(v):
        return jnp.where(take_r1,
                         pltpu.roll(v, 1, axis=1),
                         pltpu.roll(v, _PAIR_LANES - 1, axis=1))

    sw_qmp = swap(qmp)
    sw_r = swap(r)
    sw_s = swap(s)

    # cross(a, b): even lanes hold +cross, odd lanes hold -cross; the sign
    # cancels in t = qmpxs/rxs, u = qmpxr/rxs and under abs().
    qmpxs = qmp * sw_s - sw_qmp * s
    qmpxr = qmp * sw_r - sw_qmp * r
    rxs = r * sw_s - sw_r * s
    # dot(a, b): identical value at both lanes of a pair.
    rdr = r * r + sw_r * sw_r
    qmp_dot_r = qmp * r + sw_qmp * sw_r
    s_dot_r = s * r + sw_s * sw_r

    inv_rxs = 1.0 / rxs          # exact reciprocals (see header note)
    inv_rdr = 1.0 / rdr
    t = qmpxs * inv_rxs
    u = qmpxr * inv_rxs
    t0 = qmp_dot_r * inv_rdr
    t1 = t0 + s_dot_r * inv_rdr

    parallel = jnp.abs(rxs) <= _ISCLOSE_ATOL
    collinear = jnp.logical_and(parallel, jnp.abs(qmpxr) <= _ISCLOSE_ATOL)

    col_hit = jnp.logical_and(
        collinear,
        jnp.logical_and(jnp.logical_or(t0 > 0.0, t1 > 0.0),
                        jnp.logical_or(t0 < 1.0, t1 < 1.0)))
    cross_hit = jnp.logical_and(
        jnp.logical_not(parallel),
        jnp.logical_and(jnp.logical_and(t > 0.0, t < 1.0),
                        jnp.logical_and(u > 0.0, u < 1.0)))

    o_ref[...] = jnp.logical_or(col_hit, cross_hit).astype(jnp.int8)


def edges_intersect(*, edge_1_start_pos, edge_1_end_pos,
                    edge_2_start_pos, edge_2_end_pos):
    """Returns bool[N]: whether edge 1 and edge 2 intersect (per row)."""
    n = edge_1_start_pos.shape[0]
    rows_needed = max(1, -(-n // _LANES))
    num_steps = max(1, -(-rows_needed // _MAX_TILE_ROWS))
    tile_rows = -(-rows_needed // num_steps)
    tile_rows = ((tile_rows + 7) // 8) * 8          # sublane multiple of 8
    rows = tile_rows * num_steps
    n_padded = rows * _LANES

    def prep(a):
        a = jnp.asarray(a, jnp.float32)
        if n_padded != n:
            a = jnp.pad(a, ((0, n_padded - n), (0, 0)))   # zero edges -> "no hit"
        return a.reshape(rows, _PAIR_LANES)               # free contiguous view

    inputs = [prep(a) for a in (edge_1_start_pos, edge_1_end_pos,
                                edge_2_start_pos, edge_2_end_pos)]

    spec = pl.BlockSpec((tile_rows, _PAIR_LANES), lambda i: (i, 0))
    out_i8 = pl.pallas_call(
        _edges_intersect_kernel,
        out_shape=jax.ShapeDtypeStruct((rows, _PAIR_LANES), jnp.int8),
        grid=(num_steps,),
        in_specs=[spec] * 4,
        out_specs=spec,
        compiler_params=pltpu.CompilerParams(
            dimension_semantics=("parallel",)),
    )(*inputs)

    # Both lanes of a pair carry the same answer; take the even (x) lane.
    res = out_i8.reshape(n_padded, 2)[:, 0]
    return res[:n] != 0


def _edges_intersect_reference(e1s, e1e, e2s, e2e, eps=EPS):
    """Pure-jnp port of the torch module, for validation."""
    p = jnp.asarray(e1s, jnp.float32)
    q = jnp.asarray(e2s, jnp.float32)
    r = jnp.asarray(e1e, jnp.float32) - p
    s = jnp.asarray(e2e, jnp.float32) - q
    p = p + eps * r
    q = q + eps * s
    r = r * (1.0 - 2.0 * eps)
    s = s * (1.0 - 2.0 * eps)
    qmp = q - p
    cross = lambda v, u: v[:, 0] * u[:, 1] - v[:, 1] * u[:, 0]
    dot = lambda v, u: (v * u).sum(axis=-1)
    qmpxs, qmpxr = cross(qmp, s), cross(qmp, r)
    rxs, rdr = cross(r, s), dot(r, r)
    t = qmpxs / rxs
    u = qmpxr / rxs
    t0 = dot(qmp, r) / rdr
    t1 = t0 + dot(s, r) / rdr
    parallel = jnp.abs(rxs) <= _ISCLOSE_ATOL
    collinear = parallel & (jnp.abs(qmpxr) <= _ISCLOSE_ATOL)
    col = collinear & ((t0 > 0) | (t1 > 0)) & ((t0 < 1) | (t1 < 1))
    crs = (~parallel) & (t > 0) & (t < 1) & (u > 0) & (u < 1)
    return col | crs


if __name__ == "__main__":
    key = jax.random.PRNGKey(0)
    k1, k2, k3, k4 = jax.random.split(key, 4)
    N = 1024  # number of edge pairs (small demo shape)
    e1s = jax.random.uniform(k1, (N, 2), dtype=jnp.float32)
    e1e = jax.random.uniform(k2, (N, 2), dtype=jnp.float32)
    e2s = jax.random.uniform(k3, (N, 2), dtype=jnp.float32)
    e2e = jax.random.uniform(k4, (N, 2), dtype=jnp.float32)

    out = edges_intersect(edge_1_start_pos=e1s, edge_1_end_pos=e1e,
                          edge_2_start_pos=e2s, edge_2_end_pos=e2e)
    out = jax.block_until_ready(out)
    assert out.shape == (N,) and out.dtype == jnp.bool_

    ref = _edges_intersect_reference(e1s, e1e, e2s, e2e)
    assert bool(jnp.array_equal(out, jnp.asarray(ref))), "mismatch vs reference"
    print("KERNEL_OK")
</pallas_src>

<mosaic_0001>
module attributes {stable_mosaic.version = 11 : i64} {
  func.func @_edges_intersect_kernel(%arg0: i32, %arg1: memref<8x256xf32, #tpu.memory_space<vmem>>, %arg2: memref<8x256xf32, #tpu.memory_space<vmem>>, %arg3: memref<8x256xf32, #tpu.memory_space<vmem>>, %arg4: memref<8x256xf32, #tpu.memory_space<vmem>>, %arg5: memref<8x256xi8, #tpu.memory_space<vmem>>) attributes {dimension_semantics = [#tpu.dimension_semantics<parallel>], iteration_bounds = array<i64: 1>, scalar_prefetch = 0 : i64, scratch_operands = 0 : i64, tpu.core_type = #tpu.core_type<tc>, window_params = [{transform_indices = @transform_0, window_bounds = array<i64: 8, 256>}, {transform_indices = @transform_1, window_bounds = array<i64: 8, 256>}, {transform_indices = @transform_2, window_bounds = array<i64: 8, 256>}, {transform_indices = @transform_3, window_bounds = array<i64: 8, 256>}, {transform_indices = @transform_4, window_bounds = array<i64: 8, 256>}]} {
    %c0 = arith.constant 0 : index
    %c0_0 = arith.constant 0 : index
    %0 = vector.load %arg1[%c0, %c0_0] : memref<8x256xf32, #tpu.memory_space<vmem>>, vector<8x256xf32>
    %c0_1 = arith.constant 0 : index
    %c0_2 = arith.constant 0 : index
    %1 = vector.load %arg3[%c0_1, %c0_2] : memref<8x256xf32, #tpu.memory_space<vmem>>, vector<8x256xf32>
    %c0_3 = arith.constant 0 : index
    %c0_4 = arith.constant 0 : index
    %2 = vector.load %arg2[%c0_3, %c0_4] : memref<8x256xf32, #tpu.memory_space<vmem>>, vector<8x256xf32>
    %3 = arith.subf %2, %0 : vector<8x256xf32>
    %c0_5 = arith.constant 0 : index
    %c0_6 = arith.constant 0 : index
    %4 = vector.load %arg4[%c0_5, %c0_6] : memref<8x256xf32, #tpu.memory_space<vmem>>, vector<8x256xf32>
    %5 = arith.subf %4, %1 : vector<8x256xf32>
    %cst = arith.constant 9.99999997E-7 : f32
    %6 = vector.broadcast %cst : f32 to vector<8x256xf32>
    %7 = arith.mulf %6, %3 : vector<8x256xf32>
    %8 = arith.addf %0, %7 : vector<8x256xf32>
    %cst_7 = arith.constant 9.99999997E-7 : f32
    %9 = vector.broadcast %cst_7 : f32 to vector<8x256xf32>
    %10 = arith.mulf %9, %5 : vector<8x256xf32>
    %11 = arith.addf %1, %10 : vector<8x256xf32>
    %cst_8 = arith.constant 0.999997973 : f32
    %12 = vector.broadcast %cst_8 : f32 to vector<8x256xf32>
    %13 = arith.mulf %3, %12 : vector<8x256xf32>
    %cst_9 = arith.constant 0.999997973 : f32
    %14 = vector.broadcast %cst_9 : f32 to vector<8x256xf32>
    %15 = arith.mulf %5, %14 : vector<8x256xf32>
    %16 = arith.subf %11, %8 : vector<8x256xf32>
    %17 = tpu.iota {dimensions = array<i32: 1>} : vector<8x256xi32>
    %c1_i32 = arith.constant 1 : i32
    %18 = vector.broadcast %c1_i32 : i32 to vector<8x256xi32>
    %19 = arith.xori %17, %18 : vector<8x256xi32>
    %c1_i32_10 = arith.constant 1 : i32
    %20 = tpu.dynamic_rotate %17 by %c1_i32_10 dim 1 : vector<8x256xi32>, i32 -> vector<8x256xi32>
    %21 = arith.cmpi eq, %20, %19 : vector<8x256xi32>
    %c1_i32_11 = arith.constant 1 : i32
    %22 = tpu.dynamic_rotate %16 by %c1_i32_11 dim 1 : vector<8x256xf32>, i32 -> vector<8x256xf32>
    %c255_i32 = arith.constant 255 : i32
    %23 = tpu.dynamic_rotate %16 by %c255_i32 dim 1 : vector<8x256xf32>, i32 -> vector<8x256xf32>
    %24 = arith.select %21, %22, %23 : vector<8x256xi1>, vector<8x256xf32>
    %c1_i32_12 = arith.constant 1 : i32
    %25 = tpu.dynamic_rotate %13 by %c1_i32_12 dim 1 : vector<8x256xf32>, i32 -> vector<8x256xf32>
    %c255_i32_13 = arith.constant 255 : i32
    %26 = tpu.dynamic_rotate %13 by %c255_i32_13 dim 1 : vector<8x256xf32>, i32 -> vector<8x256xf32>
    %27 = arith.select %21, %25, %26 : vector<8x256xi1>, vector<8x256xf32>
    %c1_i32_14 = arith.constant 1 : i32
    %28 = tpu.dynamic_rotate %15 by %c1_i32_14 dim 1 : vector<8x256xf32>, i32 -> vector<8x256xf32>
    %c255_i32_15 = arith.constant 255 : i32
    %29 = tpu.dynamic_rotate %15 by %c255_i32_15 dim 1 : vector<8x256xf32>, i32 -> vector<8x256xf32>
    %30 = arith.select %21, %28, %29 : vector<8x256xi1>, vector<8x256xf32>
    %31 = arith.mulf %16, %30 : vector<8x256xf32>
    %32 = arith.mulf %24, %15 : vector<8x256xf32>
    %33 = arith.subf %31, %32 : vector<8x256xf32>
    %34 = arith.mulf %16, %27 : vector<8x256xf32>
    %35 = arith.mulf %24, %13 : vector<8x256xf32>
    %36 = arith.subf %34, %35 : vector<8x256xf32>
    %37 = arith.mulf %13, %30 : vector<8x256xf32>
    %38 = arith.mulf %27, %15 : vector<8x256xf32>
    %39 = arith.subf %37, %38 : vector<8x256xf32>
    %40 = arith.mulf %13, %13 : vector<8x256xf32>
    %41 = arith.mulf %27, %27 : vector<8x256xf32>
    %42 = arith.addf %40, %41 : vector<8x256xf32>
    %43 = arith.mulf %16, %13 : vector<8x256xf32>
    %44 = arith.mulf %24, %27 : vector<8x256xf32>
    %45 = arith.addf %43, %44 : vector<8x256xf32>
    %46 = arith.mulf %15, %13 : vector<8x256xf32>
    %47 = arith.mulf %30, %27 : vector<8x256xf32>
    %48 = arith.addf %46, %47 : vector<8x256xf32>
    %cst_16 = arith.constant 1.000000e+00 : f32
    %49 = vector.broadcast %cst_16 : f32 to vector<8x256xf32>
    %50 = arith.divf %49, %39 : vector<8x256xf32>
    %cst_17 = arith.constant 1.000000e+00 : f32
    %51 = vector.broadcast %cst_17 : f32 to vector<8x256xf32>
    %52 = arith.divf %51, %42 : vector<8x256xf32>
    %53 = arith.mulf %33, %50 : vector<8x256xf32>
    %54 = arith.mulf %36, %50 : vector<8x256xf32>
    %55 = arith.mulf %45, %52 : vector<8x256xf32>
    %56 = arith.mulf %48, %52 : vector<8x256xf32>
    %57 = arith.addf %55, %56 : vector<8x256xf32>
    %58 = math.absf %39 : vector<8x256xf32>
    %cst_18 = arith.constant 9.99999993E-9 : f32
    %59 = vector.broadcast %cst_18 : f32 to vector<8x256xf32>
    %60 = arith.cmpf ole, %58, %59 : vector<8x256xf32>
    %61 = math.absf %36 : vector<8x256xf32>
    %cst_19 = arith.constant 9.99999993E-9 : f32
    %62 = vector.broadcast %cst_19 : f32 to vector<8x256xf32>
    %63 = arith.cmpf ole, %61, %62 : vector<8x256xf32>
    %64 = arith.andi %60, %63 : vector<8x256xi1>
    %cst_20 = arith.constant 0.000000e+00 : f32
    %65 = vector.broadcast %cst_20 : f32 to vector<8x256xf32>
    %66 = arith.cmpf ogt, %55, %65 : vector<8x256xf32>
    %cst_21 = arith.constant 0.000000e+00 : f32
    %67 = vector.broadcast %cst_21 : f32 to vector<8x256xf32>
    %68 = arith.cmpf ogt, %57, %67 : vector<8x256xf32>
    %69 = arith.ori %66, %68 : vector<8x256xi1>
    %cst_22 = arith.constant 1.000000e+00 : f32
    %70 = vector.broadcast %cst_22 : f32 to vector<8x256xf32>
    %71 = arith.cmpf olt, %55, %70 : vector<8x256xf32>
    %cst_23 = arith.constant 1.000000e+00 : f32
    %72 = vector.broadcast %cst_23 : f32 to vector<8x256xf32>
    %73 = arith.cmpf olt, %57, %72 : vector<8x256xf32>
    %74 = arith.ori %71, %73 : vector<8x256xi1>
    %75 = arith.andi %69, %74 : vector<8x256xi1>
    %76 = arith.andi %64, %75 : vector<8x256xi1>
    %cst_24 = arith.constant dense<true> : vector<8x256xi1>
    %77 = arith.xori %60, %cst_24 : vector<8x256xi1>
    %cst_25 = arith.constant 0.000000e+00 : f32
    %78 = vector.broadcast %cst_25 : f32 to vector<8x256xf32>
    %79 = arith.cmpf ogt, %53, %78 : vector<8x256xf32>
    %cst_26 = arith.constant 1.000000e+00 : f32
    %80 = vector.broadcast %cst_26 : f32 to vector<8x256xf32>
    %81 = arith.cmpf olt, %53, %80 : vector<8x256xf32>
    %82 = arith.andi %79, %81 : vector<8x256xi1>
    %cst_27 = arith.constant 0.000000e+00 : f32
    %83 = vector.broadcast %cst_27 : f32 to vector<8x256xf32>
    %84 = arith.cmpf ogt, %54, %83 : vector<8x256xf32>
    %cst_28 = arith.constant 1.000000e+00 : f32
    %85 = vector.broadcast %cst_28 : f32 to vector<8x256xf32>
    %86 = arith.cmpf olt, %54, %85 : vector<8x256xf32>
    %87 = arith.andi %84, %86 : vector<8x256xi1>
    %88 = arith.andi %82, %87 : vector<8x256xi1>
    %89 = arith.andi %77, %88 : vector<8x256xi1>
    %90 = arith.ori %76, %89 : vector<8x256xi1>
    %91 = arith.extui %90 : vector<8x256xi1> to vector<8x256xi8>
    %c0_29 = arith.constant 0 : index
    %c0_30 = arith.constant 0 : index
    %92 = vector.load %arg5[%c0_29, %c0_30] : memref<8x256xi8, #tpu.memory_space<vmem>>, vector<8x256xi8>
    tpu.vector_store %arg5[%c0_29, %c0_30], %91 {strides = array<i32>} : memref<8x256xi8, #tpu.memory_space<vmem>>, vector<8x256xi8>,
    return
  }
  func.func @transform_0(%arg0: i32) -> (i32, i32) {
    %c0_i32 = arith.constant 0 : i32
    %c0_i32_0 = arith.constant 0 : i32
    return %arg0, %c0_i32 : i32, i32
  }
  func.func @transform_1(%arg0: i32) -> (i32, i32) {
    %c0_i32 = arith.constant 0 : i32
    %c0_i32_0 = arith.constant 0 : i32
    return %arg0, %c0_i32 : i32, i32
  }
  func.func @transform_2(%arg0: i32) -> (i32, i32) {
    %c0_i32 = arith.constant 0 : i32
    %c0_i32_0 = arith.constant 0 : i32
    return %arg0, %c0_i32 : i32, i32
  }
  func.func @transform_3(%arg0: i32) -> (i32, i32) {
    %c0_i32 = arith.constant 0 : i32
    %c0_i32_0 = arith.constant 0 : i32
    return %arg0, %c0_i32 : i32, i32
  }
  func.func @transform_4(%arg0: i32) -> (i32, i32) {
    %c0_i32 = arith.constant 0 : i32
    %c0_i32_0 = arith.constant 0 : i32
    return %arg0, %c0_i32 : i32, i32
  }
}

</mosaic_0001>

<llo_original>
// kernel: tpu_custom_call.1
$region0: #{tpu_custom_call.1}
  #allocation0 [shape = 'u32[]', space=smem, size = 0x4, offset = 0x4, fixed_abs, tag = 'smem constant byte address 0x4 - core index']
  #allocation1 [shape = 'u32[72,128]{1,0:T(1,128)}', space=vmem, size = 0x9000, scoped, tag = 'internal scratch']
  %s0 = inlined_call_operand.hbm [shape: f32[8,256], index: 0, kind: input, shape index: {}]
  %s1 = inlined_call_operand.hbm [shape: f32[8,256], index: 1, kind: input, shape index: {}]
  %s2 = inlined_call_operand.hbm [shape: f32[8,256], index: 2, kind: input, shape index: {}]
  %s3 = inlined_call_operand.hbm [shape: f32[8,256], index: 3, kind: input, shape index: {}]
  %s4 = inlined_call_operand.hbm [shape: s8[8,256], index: 4, kind: output, shape index: {}]
  %s5 = sld [smem:[#allocation0]]
  $region42: #{tpu_custom_call.1} parent=0
    _
  %s7 = ssub.s32 1, %s5
  %s8 = scalar_select 0, %s7, %s5
  $region1: #{tpu_custom_call.1} parent=0
    #allocation2 [shape = 'u8[8192]{0}', space=vmem, size = 0x2000, scoped, tag = 'input window, operand 0, single buffered']
    #allocation3 [shape = 's32[1]{0}', space=sflag, size = 0x4, scoped, tag = 'scoped memory for tpu_custom_call.1']
    #allocation4 [shape = 's32[1]{0}', space=sflag, size = 0x4, scoped, tag = 'scoped memory for tpu_custom_call.1']
    #allocation5 [shape = 'u8[8192]{0}', space=vmem, size = 0x2000, scoped, tag = 'input window, operand 1, single buffered']
    #allocation6 [shape = 's32[1]{0}', space=sflag, size = 0x4, scoped, tag = 'scoped memory for tpu_custom_call.1']
    #allocation7 [shape = 'u8[8192]{0}', space=vmem, size = 0x2000, scoped, tag = 'input window, operand 2, single buffered']
    #allocation8 [shape = 'u8[8192]{0}', space=vmem, size = 0x2000, scoped, tag = 'input window, operand 3, single buffered']
    #allocation9 [shape = 's32[1]{0}', space=sflag, size = 0x4, scoped, tag = 'scoped memory for tpu_custom_call.1']
    #allocation10 [shape = 'u8[2048]{0}', space=vmem, size = 0x800, scoped, tag = 'output window, operand 0, single buffered']
    %9 = vsyncpa [#allocation3], 0
    %10 = vsyncpa [#allocation6], 0
    %11 = vsyncpa [#allocation9], 0
    %12 = vsyncpa [#allocation4], 0
    // Predicated region
    $region2: #{tpu_custom_call.1} parent=1 // pred_check
      _
    $region3: #{tpu_custom_call.1} parent=1 // pred_check_branch
      %14 = sbr.rel (0) target = $region5
    $region4: #{tpu_custom_call.1} parent=1 // pred_region
      %16 = vsyncadd [#allocation3], 0
      %s18 = sshll.u32 %s0, 4
      %s19 = int_to_ptr.hbm [resolvable:$true] %s18
      %s20 = sshll.u32 [#allocation2], 4
      %s21 = int_to_ptr.vmem [resolvable:$true] %s20
      %23 = dma.hbm_to_vmem [thread:$0]  %s19, 256, %s21, [#allocation3]
    $region5: #{tpu_custom_call.1} parent=1 // pred_fallthru
      _
    // Predicated region
    $region6: #{tpu_custom_call.1} parent=1 // pred_check
      _
    $region7: #{tpu_custom_call.1} parent=1 // pred_check_branch
      %25 = sbr.rel (0) target = $region9
    $region8: #{tpu_custom_call.1} parent=1 // pred_region
      %27 = vsyncadd [#allocation6], 0
      %s29 = sshll.u32 %s1, 4
      %s30 = int_to_ptr.hbm [resolvable:$true] %s29
      %s31 = sshll.u32 [#allocation5], 4
      %s32 = int_to_ptr.vmem [resolvable:$true] %s31
      %34 = dma.hbm_to_vmem [thread:$0]  %s30, 256, %s32, [#allocation6]
    $region9: #{tpu_custom_call.1} parent=1 // pred_fallthru
      _
    // Predicated region
    $region10: #{tpu_custom_call.1} parent=1 // pred_check
      _
    $region11: #{tpu_custom_call.1} parent=1 // pred_check_branch
      %36 = sbr.rel (0) target = $region13
    $region12: #{tpu_custom_call.1} parent=1 // pred_region
      %38 = vsyncadd [#allocation6], 0
      %s40 = sshll.u32 %s2, 4
      %s41 = int_to_ptr.hbm [resolvable:$true] %s40
      %s42 = sshll.u32 [#allocation7], 4
      %s43 = int_to_ptr.vmem [resolvable:$true] %s42
      %45 = dma.hbm_to_vmem [thread:$0]  %s41, 256, %s43, [#allocation6]
    $region13: #{tpu_custom_call.1} parent=1 // pred_fallthru
      _
    // Predicated region
    $region14: #{tpu_custom_call.1} parent=1 // pred_check
      _
    $region15: #{tpu_custom_call.1} parent=1 // pred_check_branch
      %47 = sbr.rel (0) target = $region17
    $region16: #{tpu_custom_call.1} parent=1 // pred_region
      %49 = vsyncadd [#allocation9], 0
      %s51 = sshll.u32 %s3, 4
      %s52 = int_to_ptr.hbm [resolvable:$true] %s51
      %s53 = sshll.u32 [#allocation8], 4
      %s54 = int_to_ptr.vmem [resolvable:$true] %s53
      %56 = dma.hbm_to_vmem [thread:$0]  %s52, 256, %s54, [#allocation9]
    $region17: #{tpu_custom_call.1} parent=1 // pred_fallthru
      _
    // Predicated region
    $region18: #{tpu_custom_call.1} parent=1 // pred_check
      _
    $region19: #{tpu_custom_call.1} parent=1 // pred_check_branch
      %58 = sbr.rel (0) target = $region21
    $region20: #{tpu_custom_call.1} parent=1 // pred_region
      %60 = dma.done [#allocation3], 256
    $region21: #{tpu_custom_call.1} parent=1 // pred_fallthru
      _
    // Predicated region
    $region22: #{tpu_custom_call.1} parent=1 // pred_check
      _
    $region23: #{tpu_custom_call.1} parent=1 // pred_check_branch
      %62 = sbr.rel (0) target = $region25
    $region24: #{tpu_custom_call.1} parent=1 // pred_region
      %64 = dma.done [#allocation6], 256
    $region25: #{tpu_custom_call.1} parent=1 // pred_fallthru
      _
    // Predicated region
    $region26: #{tpu_custom_call.1} parent=1 // pred_check
      _
    $region27: #{tpu_custom_call.1} parent=1 // pred_check_branch
      %66 = sbr.rel (0) target = $region29
    $region28: #{tpu_custom_call.1} parent=1 // pred_region
      %68 = dma.done [#allocation6], 256
    $region29: #{tpu_custom_call.1} parent=1 // pred_fallthru
      _
    // Predicated region
    $region30: #{tpu_custom_call.1} parent=1 // pred_check
      _
    $region31: #{tpu_custom_call.1} parent=1 // pred_check_branch
      %70 = sbr.rel (0) target = $region33
    $region32: #{tpu_custom_call.1} parent=1 // pred_region
      %72 = dma.done [#allocation9], 256
    $region33: #{tpu_custom_call.1} parent=1 // pred_fallthru
      _
    %v75 = vld [vmem:[#allocation2] sm:$0xff]
    %v76 = vld [vmem:[#allocation2 + $0x8] sm:$0xff]
    %v77 = vld [vmem:[#allocation7] sm:$0xff]
    %v78 = vld [vmem:[#allocation7 + $0x8] sm:$0xff]
    %v79 = vld [vmem:[#allocation5] sm:$0xff]
    %v80 = vld [vmem:[#allocation5 + $0x8] sm:$0xff]
    %v81 = vsub.f32 %v79, %v75
    %v82 = vsub.f32 %v80, %v76
    %v83 = vld [vmem:[#allocation8] sm:$0xff]
    %v84 = vld [vmem:[#allocation8 + $0x8] sm:$0xff]
    %v85 = vsub.f32 %v83, %v77
    %v86 = vsub.f32 %v84, %v78
    %v87 = vmul.f32 %v81, 1e-06
    %v88 = vmul.f32 %v82, 1e-06
    %v89 = vadd.f32 %v75, %v87
    %v90 = vadd.f32 %v76, %v88
    %v91 = vmul.f32 %v85, 1e-06
    %v92 = vmul.f32 %v86, 1e-06
    %v93 = vadd.f32 %v77, %v91
    %v94 = vadd.f32 %v78, %v92
    %v95 = vmul.f32 %v81, 0.999998
    %v96 = vmul.f32 %v82, 0.999998
    %v97 = vmul.f32 %v85, 0.999998
    %v98 = vmul.f32 %v86, 0.999998
    %v99 = vsub.f32 %v93, %v89
    %v100 = vsub.f32 %v94, %v90
    %v101 = vlaneseq
    %v102 = vand.u32 %v101, 127
    %v103 = vadd.s32 %v102, 128
    %v104 = vxor.u32 %v102, 1
    %v105 = vxor.u32 %v103, 1
    %106 = vrot.lane.b32.xlu0 %v102, 1
    %v107 = vpop.permute.xlu0 %106
    %108 = vrot.lane.b32.xlu0 %v103, 1
    %v109 = vpop.permute.xlu0 %108
    %vm110 = vcmp.lt.s32.totalorder %v102, 1
    %v111 = vsel %vm110, %v107, %v109
    %v112 = vsel %vm110, %v109, %v107
    %vm113 = vcmp.eq.s32.totalorder %v112, %v104
    %vm114 = vcmp.eq.s32.totalorder %v111, %v105
    %115 = vrot.lane.b32.xlu0 %v99, 1
    %v116 = vpop.permute.xlu0 %115
    %117 = vrot.lane.b32.xlu0 %v100, 1
    %v118 = vpop.permute.xlu0 %117
    %v119 = vsel %vm110, %v116, %v118
    %v120 = vsel %vm110, %v118, %v116
    %121 = vrot.lane.b32.xlu0 %v99, 127
    %v122 = vpop.permute.xlu0 %121
    %123 = vrot.lane.b32.xlu0 %v100, 127
    %v124 = vpop.permute.xlu0 %123
    %vm125 = vcmp.lt.s32.totalorder %v102, 127
    %v126 = vsel %vm125, %v122, %v124
    %v127 = vsel %vm125, %v124, %v122
    %v128 = vsel %vm113, %v120, %v126
    %v129 = vsel %vm114, %v119, %v127
    %130 = vrot.lane.b32.xlu0 %v95, 1
    %v131 = vpop.permute.xlu0 %130
    %132 = vrot.lane.b32.xlu0 %v96, 1
    %v133 = vpop.permute.xlu0 %132
    %v134 = vsel %vm110, %v131, %v133
    %v135 = vsel %vm110, %v133, %v131
    %136 = vrot.lane.b32.xlu0 %v95, 127
    %v137 = vpop.permute.xlu0 %136
    %138 = vrot.lane.b32.xlu0 %v96, 127
    %v139 = vpop.permute.xlu0 %138
    %v140 = vsel %vm125, %v137, %v139
    %v141 = vsel %vm125, %v139, %v137
    %v142 = vsel %vm113, %v135, %v140
    %v143 = vsel %vm114, %v134, %v141
    %144 = vrot.lane.b32.xlu0 %v97, 1
    %v145 = vpop.permute.xlu0 %144
    %146 = vrot.lane.b32.xlu0 %v98, 1
    %v147 = vpop.permute.xlu0 %146
    %v148 = vsel %vm110, %v145, %v147
    %v149 = vsel %vm110, %v147, %v145
    %150 = vrot.lane.b32.xlu0 %v97, 127
    %v151 = vpop.permute.xlu0 %150
    %152 = vrot.lane.b32.xlu0 %v98, 127
    %v153 = vpop.permute.xlu0 %152
    %v154 = vsel %vm125, %v151, %v153
    %v155 = vsel %vm125, %v153, %v151
    %v156 = vsel %vm113, %v149, %v154
    %v157 = vsel %vm114, %v148, %v155
    %v158 = vmul.f32 %v99, %v156
    %v159 = vmul.f32 %v100, %v157
    %v160 = vmul.f32 %v128, %v97
    %v161 = vmul.f32 %v129, %v98
    %v162 = vsub.f32 %v158, %v160
    %v163 = vsub.f32 %v159, %v161
    %v164 = vmul.f32 %v99, %v142
    %v165 = vmul.f32 %v100, %v143
    %v166 = vmul.f32 %v128, %v95
    %v167 = vmul.f32 %v129, %v96
    %v168 = vsub.f32 %v164, %v166
    %v169 = vsub.f32 %v165, %v167
    %v170 = vmul.f32 %v95, %v156
    %v171 = vmul.f32 %v96, %v157
    %v172 = vmul.f32 %v142, %v97
    %v173 = vmul.f32 %v143, %v98
    %v174 = vsub.f32 %v170, %v172
    %v175 = vsub.f32 %v171, %v173
    %v176 = vmul.f32 %v95, %v95
    %v177 = vmul.f32 %v96, %v96
    %v178 = vmul.f32 %v142, %v142
    %v179 = vmul.f32 %v143, %v143
    %v180 = vadd.f32 %v176, %v178
    %v181 = vadd.f32 %v177, %v179
    %v182 = vmul.f32 %v99, %v95
    %v183 = vmul.f32 %v100, %v96
    %v184 = vmul.f32 %v128, %v142
    %v185 = vmul.f32 %v129, %v143
    %v186 = vadd.f32 %v182, %v184
    %v187 = vadd.f32 %v183, %v185
    %v188 = vmul.f32 %v97, %v95
    %v189 = vmul.f32 %v98, %v96
    %v190 = vmul.f32 %v156, %v142
    %v191 = vmul.f32 %v157, %v143
    %v192 = vadd.f32 %v188, %v190
    %v193 = vadd.f32 %v189, %v191
    %v194 = vrcp.pop %v174
    %v195 = vmul.f32 %v174, %v194
    %v196 = vsub.f32 1.0, %v195
    %v197 = vmul.f32 %v194, %v196
    %v198 = vadd.f32 %v194, %v197
    %vm199 = vweird.f32 %v174
    %vm200 = vweird.f32 %v194
    %vm201 = vmor %vm199, %vm200
    %v202 = vsel %vm201, %v194, %v198
    %v203 = vand.u32 2147483647, %v174
    %vm204 = vcmp.eq.f32.partialorder %v203, 8.507059e+37
    %v205 = vand.u32 %v174, 2147483648
    %v206 = vor.u32 1.1754944e-38, %v205
    %v207 = vsel %vm204, %v206, %v202
    %v208 = vmul.f32 1.0, %v207
    %v209 = vrcp.pop %v175
    %v210 = vmul.f32 %v175, %v209
    %v211 = vsub.f32 1.0, %v210
    %v212 = vmul.f32 %v209, %v211
    %v213 = vadd.f32 %v209, %v212
    %vm214 = vweird.f32 %v175
    %vm215 = vweird.f32 %v209
    %vm216 = vmor %vm214, %vm215
    %v217 = vsel %vm216, %v209, %v213
    %v218 = vand.u32 2147483647, %v175
    %vm219 = vcmp.eq.f32.partialorder %v218, 8.507059e+37
    %v220 = vand.u32 %v175, 2147483648
    %v221 = vor.u32 1.1754944e-38, %v220
    %v222 = vsel %vm219, %v221, %v217
    %v223 = vmul.f32 1.0, %v222
    %v224 = vrcp.pop %v180
    %v225 = vmul.f32 %v180, %v224
    %v226 = vsub.f32 1.0, %v225
    %v227 = vmul.f32 %v224, %v226
    %v228 = vadd.f32 %v224, %v227
    %vm229 = vweird.f32 %v180
    %vm230 = vweird.f32 %v224
    %vm231 = vmor %vm229, %vm230
    %v232 = vsel %vm231, %v224, %v228
    %v233 = vand.u32 2147483647, %v180
    %vm234 = vcmp.eq.f32.partialorder %v233, 8.507059e+37
    %v235 = vand.u32 %v180, 2147483648
    %v236 = vor.u32 1.1754944e-38, %v235
    %v237 = vsel %vm234, %v236, %v232
    %v238 = vmul.f32 1.0, %v237
    %v239 = vrcp.pop %v181
    %v240 = vmul.f32 %v181, %v239
    %v241 = vsub.f32 1.0, %v240
    %v242 = vmul.f32 %v239, %v241
    %v243 = vadd.f32 %v239, %v242
    %vm244 = vweird.f32 %v181
    %vm245 = vweird.f32 %v239
    %vm246 = vmor %vm244, %vm245
    %v247 = vsel %vm246, %v239, %v243
    %v248 = vand.u32 2147483647, %v181
    %vm249 = vcmp.eq.f32.partialorder %v248, 8.507059e+37
    %v250 = vand.u32 %v181, 2147483648
    %v251 = vor.u32 1.1754944e-38, %v250
    %v252 = vsel %vm249, %v251, %v247
    %v253 = vmul.f32 1.0, %v252
    %v254 = vmul.f32 %v162, %v208
    %v255 = vmul.f32 %v163, %v223
    %v256 = vmul.f32 %v168, %v208
    %v257 = vmul.f32 %v169, %v223
    %v258 = vmul.f32 %v186, %v238
    %v259 = vmul.f32 %v187, %v253
    %v260 = vmul.f32 %v192, %v238
    %v261 = vmul.f32 %v193, %v253
    %v262 = vadd.f32 %v258, %v260
    %v263 = vadd.f32 %v259, %v261
    %v264 = vand.u32 2147483647, %v174
    %v265 = vand.u32 2147483647, %v175
    %vm266 = vcmp.le.f32.partialorder %v264, 1e-08
    %vm267 = vcmp.le.f32.partialorder %v265, 1e-08
    %v268 = vand.u32 2147483647, %v168
    %v269 = vand.u32 2147483647, %v169
    %vm270 = vcmp.le.f32.partialorder %v268, 1e-08
    %vm271 = vcmp.le.f32.partialorder %v269, 1e-08
    %vm272 = vmand %vm266, %vm270
    %vm273 = vmand %vm267, %vm271
    %vm274 = vcmp.gt.f32.partialorder %v258, 0.0
    %vm275 = vcmp.gt.f32.partialorder %v259, 0.0
    %vm276 = vcmp.gt.f32.partialorder %v262, 0.0
    %vm277 = vcmp.gt.f32.partialorder %v263, 0.0
    %vm278 = vmor %vm274, %vm276
    %vm279 = vmor %vm275, %vm277
    %vm280 = vcmp.lt.f32.partialorder %v258, 1.0
    %vm281 = vcmp.lt.f32.partialorder %v259, 1.0
    %vm282 = vcmp.lt.f32.partialorder %v262, 1.0
    %vm283 = vcmp.lt.f32.partialorder %v263, 1.0
    %vm284 = vmor %vm280, %vm282
    %vm285 = vmor %vm281, %vm283
    %vm286 = vmand %vm278, %vm284
    %vm287 = vmand %vm279, %vm285
    %vm288 = vmand %vm272, %vm286
    %vm289 = vmand %vm273, %vm287
    %vm290 = vmxor %vm266, 1
    %vm291 = vmxor %vm267, 1
    %vm292 = vcmp.gt.f32.partialorder %v254, 0.0
    %vm293 = vcmp.gt.f32.partialorder %v255, 0.0
    %vm294 = vcmp.lt.f32.partialorder %v254, 1.0
    %vm295 = vcmp.lt.f32.partialorder %v255, 1.0
    %vm296 = vmand %vm292, %vm294
    %vm297 = vmand %vm293, %vm295
    %vm298 = vcmp.gt.f32.partialorder %v256, 0.0
    %vm299 = vcmp.gt.f32.partialorder %v257, 0.0
    %vm300 = vcmp.lt.f32.partialorder %v256, 1.0
    %vm301 = vcmp.lt.f32.partialorder %v257, 1.0
    %vm302 = vmand %vm298, %vm300
    %vm303 = vmand %vm299, %vm301
    %vm304 = vmand %vm296, %vm302
    %vm305 = vmand %vm297, %vm303
    %vm306 = vmand %vm290, %vm304
    %vm307 = vmand %vm291, %vm305
    %vm308 = vmor %vm288, %vm306
    %vm309 = vmor %vm289, %vm307
    %vm310 = vmpackc.low %vm308, %vm308
    %v311 = vsel %vm310, 16711935, 0
    %v312 = vsel %vm310, 16711935, 0
    %v313 = vpack.c.b8 %v312, %v311
    %vm314 = vnez %v313
    %vm315 = vmpackc.low %vm309, %vm309
    %v316 = vsel %vm315, 16711935, 0
    %v317 = vsel %vm315, 16711935, 0
    %v318 = vpack.c.b8 %v317, %v316
    %vm319 = vnez %v318
    %v320 = vsel %vm314, 16843009, 0
    %v321 = vsel %vm319, 16843009, 0
    %v322 = vunpack.c.0.s8 %v320
    %v323 = vunpack.c.0.s8 %v321
    %v324 = vpack.c.b16 %v323, %v322
    %v325 = vpack.c.b8 %v324, %v324
    %326 = vst [vmem:[#allocation10] sm:$0xf] %v325
    // Predicated region
    $region34: #{tpu_custom_call.1} parent=1 // pred_check
      _
    $region35: #{tpu_custom_call.1} parent=1 // pred_check_branch
      %328 = sbr.rel (0) target = $region37
    $region36: #{tpu_custom_call.1} parent=1 // pred_region
      %330 = vsyncadd [#allocation4], 0
      %s332 = sshll.u32 [#allocation10], 4
      %s333 = int_to_ptr.vmem [resolvable:$true] %s332
      %s334 = sshll.u32 %s4, 4
      %s335 = int_to_ptr.hbm [resolvable:$true] %s334
      %337 = dma.vmem_to_hbm [thread:$0]  %s333, 64, %s335, [#allocation4]
    $region37: #{tpu_custom_call.1} parent=1 // pred_fallthru
      _
    // Predicated region
    $region38: #{tpu_custom_call.1} parent=1 // pred_check
      _
    $region39: #{tpu_custom_call.1} parent=1 // pred_check_branch
      %339 = sbr.rel (0) target = $region41
    $region40: #{tpu_custom_call.1} parent=1 // pred_region
      %341 = dma.done [#allocation4], 64
    $region41: #{tpu_custom_call.1} parent=1 // pred_fallthru
      _
    %342 = vsyncpa [#allocation3], 1
    %343 = vsyncpa [#allocation6], 1
    %344 = vsyncpa [#allocation9], 1
    %345 = vsyncpa [#allocation4], 1

</llo_original>
